<compile_context>
chip_gen: v7x
topology: tpu7x:2x2x1
jax: 0.10.0
libtpu: 0.0.40
codegen_flags: <defaults>
</compile_context>

<pallas_src>
import numpy as np
import jax
import jax.numpy as jnp
from jax.experimental import pallas as pl
from jax.experimental.pallas import tpu as pltpu

HIDDEN = 32          # hidden_channels
HEADS = 4            # heads
HEAD_DIM = HIDDEN // HEADS
OUT_CHANNELS = 8     # out_channels of the classification head
OUT_PAD = 128        # lane-dense padded head width
NEG_SLOPE = 0.2      # HANConv default negative_slope
NEG_BIG = 1e30


def _round_up(x, m):
    return ((x + m - 1) // m) * m


# ----------------------------------------------------------------- kernels --

def _build_projection_kernel(n_types):
    """out_t = x_t @ W_t + b_t for every needed node type, one fused call."""
    def kernel(*refs):
        ins = refs[:3 * n_types]
        outs = refs[3 * n_types:]
        for t in range(n_types):
            x_ref, w_ref, b_ref = ins[3 * t:3 * t + 3]
            outs[t][...] = (jnp.dot(x_ref[...], w_ref[...],
                                    preferred_element_type=jnp.float32)
                            + b_ref[...])
    return kernel


def _build_attention_kernel(n_src, rel_src_index):
    """Node-level attention for one destination-node tile, all relations.

    Ref order: proj_tgt_tile (T,32), n_src full src projections,
               per relation [adj_i8 (T,Ns), A_src_blk (H,32), A_dst_blk (H,32)],
               out (n_rel, T, 32).
    """
    n_rel = len(rel_src_index)

    def kernel(*refs):
        proj_tgt_ref = refs[0]
        src_refs = refs[1:1 + n_src]
        rel_refs = refs[1 + n_src:1 + n_src + 3 * n_rel]
        out_ref = refs[1 + n_src + 3 * n_rel]

        h_dst = proj_tgt_ref[...]                                  # (T, 32)
        tile = h_dst.shape[0]

        # Hoisted per-head lane masks (constants).
        col = jax.lax.broadcasted_iota(jnp.int32, (1, HIDDEN), 1)
        head_masks = [
            ((col >= h * HEAD_DIM) & (col < (h + 1) * HEAD_DIM)
             ).astype(jnp.float32)
            for h in range(HEADS)
        ]

        for e in range(n_rel):
            adj_ref, asrc_ref, adst_ref = rel_refs[3 * e:3 * e + 3]
            h_src = src_refs[rel_src_index[e]][...]                # (Ns, 32)

            # (H, Ns) / (H, T): contract the hidden dim on the MXU, head on
            # the leading axis (no (N,4) lane-sparse tensors, no transposes).
            a_src = jax.lax.dot_general(
                asrc_ref[...], h_src, (((1,), (1,)), ((), ())),
                preferred_element_type=jnp.float32)
            a_dst = jax.lax.dot_general(
                adst_ref[...], h_dst, (((1,), (1,)), ((), ())),
                preferred_element_type=jnp.float32)

            adj_f = adj_ref[...].astype(jnp.float32)               # (T, Ns)
            bias = (adj_f - 1.0) * NEG_BIG                         # 0 / -1e30

            # Masked softmax over sources, all heads at once.
            logits = a_dst[:, :, None] + a_src[:, None, :]         # (H, T, Ns)
            logits = jnp.where(logits >= 0.0, logits, NEG_SLOPE * logits)
            logits = logits + bias[None]
            m = jnp.max(logits, axis=-1, keepdims=True)
            p = jnp.exp(logits - m) * adj_f[None]
            denom = jnp.sum(p, axis=-1, keepdims=True)
            # zero in-degree rows: p is all-zero -> attention is 0.
            attn = p * (1.0 / jnp.maximum(denom, 1e-30))           # (H, T, Ns)

            # Head-wise aggregation with full-width (Ns,32) masked value
            # matrices, accumulated on the VPU -> a lane-dense (T,32) slab.
            acc = jnp.zeros((tile, HIDDEN), jnp.float32)
            for h in range(HEADS):
                acc = acc + jnp.dot(attn[h], h_src * head_masks[h],
                                    preferred_element_type=jnp.float32)
            out_ref[e, :, :] = jnp.maximum(acc, 0.0)
    return kernel


def _build_semantic_kernel(n_rel, n_valid):
    """Semantic attention across relations + padded classification head."""
    def kernel(rel_ref, kw_ref, kb_ref, q_ref, lw_ref, lb_ref, o_ref):
        kw = kw_ref[...]
        kb = kb_ref[...]
        q = q_ref[...]
        nd_pad = rel_ref.shape[1]

        row = jax.lax.broadcasted_iota(jnp.int32, (nd_pad, 1), 0)
        valid = (row < n_valid).astype(jnp.float32)                # mask pads
        inv_n = 1.0 / float(n_valid)

        rel_list = [rel_ref[e] for e in range(n_rel)]              # (Nd,32)
        scores = []
        for e in range(n_rel):
            t = jnp.tanh(jnp.dot(rel_list[e], kw,
                                 preferred_element_type=jnp.float32) + kb)
            mean_t = jnp.sum(t * valid, axis=0, keepdims=True) * inv_n
            scores.append(jnp.sum(mean_t * q, axis=-1, keepdims=True))

        mmax = scores[0]
        for s in scores[1:]:
            mmax = jnp.maximum(mmax, s)
        exps = [jnp.exp(s - mmax) for s in scores]
        den = exps[0]
        for x in exps[1:]:
            den = den + x
        inv_den = 1.0 / den

        sem = (exps[0] * inv_den) * rel_list[0]
        for e in range(1, n_rel):
            sem = sem + (exps[e] * inv_den) * rel_list[e]

        # Lane-dense (Nd, 128) store; wrapper slices back to 8 columns.
        o_ref[...] = (jnp.dot(sem, lw_ref[...],
                              preferred_element_type=jnp.float32) + lb_ref[...])
    return kernel


# ----------------------------------------------------------------- wrapper --

def _head_block(att):
    """(H, D) attention vectors -> (H, H*D) block layout so that
    a[h, n] = sum_d att[h, d] * h[n, h*D + d] is a single dot_general."""
    att = np.asarray(att)
    H, D = att.shape
    m = np.zeros((H, H * D), np.float32)
    for h in range(H):
        m[h, h * D:(h + 1) * D] = att[h]
    return jnp.asarray(m)


def han_forward(params, x_dict, edge_index_dict, metadata, target_node_type,
                *, tile_nd=256):
    node_types, edge_types = metadata

    # Only relations ending at the target node type contribute to the output.
    kept = [et for et in edge_types if et[2] == target_node_type]
    assert kept, "target node type has no incoming relations"
    src_types = []
    for et in kept:
        if et[0] not in src_types:
            src_types.append(et[0])
    needed = [target_node_type] + [t for t in src_types if t != target_node_type]

    n_tgt = x_dict[target_node_type].shape[0]
    tile_nd = min(tile_nd, _round_up(n_tgt, 32))
    assert tile_nd % 32 == 0, "tile must stay aligned to int8 sublane packing"
    nd_pad = _round_up(n_tgt, tile_nd)
    num_tiles = nd_pad // tile_nd

    n_rows_pad = {nt: x_dict[nt].shape[0] for nt in needed}
    n_rows_pad[target_node_type] = nd_pad

    # ---------------- Call 1: per-node-type projection ----------------------
    proj_inputs = []
    for nt in needed:
        x = x_dict[nt].astype(jnp.float32)
        if n_rows_pad[nt] != x.shape[0]:
            x = jnp.pad(x, ((0, n_rows_pad[nt] - x.shape[0]), (0, 0)))
        w, b = params["proj"][nt]
        proj_inputs += [x, w, b.reshape(1, HIDDEN)]

    proj_out_shapes = tuple(
        jax.ShapeDtypeStruct((n_rows_pad[nt], HIDDEN), jnp.float32)
        for nt in needed)
    projs = pl.pallas_call(
        _build_projection_kernel(len(needed)),
        out_shape=proj_out_shapes,
        grid=(1,),
        in_specs=[pl.BlockSpec(a.shape, lambda i: (0, 0)) for a in proj_inputs],
        out_specs=tuple(pl.BlockSpec(s.shape, lambda i: (0, 0))
                        for s in proj_out_shapes),
    )(*proj_inputs)
    proj = {nt: p for nt, p in zip(needed, projs)}

    # ---------------- Call 2: node-level attention (tiled over Nd) ----------
    attn_inputs = [proj[target_node_type]]
    attn_in_specs = [pl.BlockSpec((tile_nd, HIDDEN), lambda i: (i, 0))]
    for st in src_types:
        attn_inputs.append(proj[st])
        attn_in_specs.append(
            pl.BlockSpec((n_rows_pad[st], HIDDEN), lambda i: (0, 0)))

    rel_src_index = []
    for et in kept:
        src = et[0]
        ns = n_rows_pad[src]
        ei = np.asarray(edge_index_dict[et])
        adj = np.zeros((nd_pad, ns), np.int8)
        adj[ei[1], ei[0]] = 1                       # int8 adjacency (4x less HBM)
        att_src, att_dst = params["att"][et]
        attn_inputs += [jnp.asarray(adj), _head_block(att_src),
                        _head_block(att_dst)]
        attn_in_specs += [
            pl.BlockSpec((tile_nd, ns), lambda i: (i, 0)),
            pl.BlockSpec((HEADS, HIDDEN), lambda i: (0, 0)),
            pl.BlockSpec((HEADS, HIDDEN), lambda i: (0, 0)),
        ]
        rel_src_index.append(src_types.index(src))

    rel_out = pl.pallas_call(
        _build_attention_kernel(len(src_types), rel_src_index),
        out_shape=jax.ShapeDtypeStruct((len(kept), nd_pad, HIDDEN), jnp.float32),
        grid=(num_tiles,),
        in_specs=attn_in_specs,
        out_specs=pl.BlockSpec((len(kept), tile_nd, HIDDEN),
                               lambda i: (0, i, 0)),
        compiler_params=pltpu.CompilerParams(
            dimension_semantics=("parallel",)),
    )(*attn_inputs)

    # ---------------- Call 3: semantic attention + head ---------------------
    lw, lb = params["lin"]
    lw_pad = jnp.zeros((HIDDEN, OUT_PAD), jnp.float32).at[:, :OUT_CHANNELS].set(lw)
    lb_pad = jnp.zeros((1, OUT_PAD), jnp.float32).at[:, :OUT_CHANNELS].set(lb)
    sem_inputs = [rel_out, params["k_lin_w"],
                  params["k_lin_b"].reshape(1, HIDDEN),
                  params["q"].reshape(1, HIDDEN), lw_pad, lb_pad]
    sem_in_specs = ([pl.BlockSpec(rel_out.shape, lambda i: (0, 0, 0))]
                    + [pl.BlockSpec(a.shape, lambda i: (0, 0))
                       for a in sem_inputs[1:]])

    out_pad = pl.pallas_call(
        _build_semantic_kernel(len(kept), n_tgt),
        out_shape=jax.ShapeDtypeStruct((nd_pad, OUT_PAD), jnp.float32),
        grid=(1,),
        in_specs=sem_in_specs,
        out_specs=pl.BlockSpec((nd_pad, OUT_PAD), lambda i: (0, 0)),
    )(*sem_inputs)

    return out_pad[:n_tgt, :OUT_CHANNELS]


# ------------------------------------------------------- pure-JAX reference --

def han_forward_ref(params, x_dict, edge_index_dict, metadata, target_node_type):
    node_types, edge_types = metadata
    h_dict = {}
    for nt in node_types:
        w, b = params["proj"][nt]
        h = x_dict[nt].astype(jnp.float32) @ w + b
        h_dict[nt] = h.reshape(h.shape[0], HEADS, HEAD_DIM)
    out_dict = {nt: [] for nt in node_types}
    for et in edge_types:
        src, _, dst = et
        xs, xd = h_dict[src], h_dict[dst]
        att_src, att_dst = params["att"][et]
        a_s = jnp.einsum("nhd,hd->nh", xs, att_src)
        a_d = jnp.einsum("nhd,hd->nh", xd, att_dst)
        Ns, Nd = xs.shape[0], xd.shape[0]
        ei = edge_index_dict[et]
        adj = jnp.zeros((Nd, Ns), jnp.float32).at[ei[1], ei[0]].set(1.0)
        mask = adj > 0.5
        logits = a_d[:, None, :] + a_s[None, :, :]
        logits = jnp.where(logits >= 0.0, logits, NEG_SLOPE * logits)
        logits = jnp.where(mask[:, :, None], logits, -1e30)
        m = jnp.max(logits, axis=1, keepdims=True)
        p = jnp.where(mask[:, :, None], jnp.exp(logits - m), 0.0)
        denom = jnp.sum(p, axis=1, keepdims=True)
        attn = jnp.where(denom > 0.0, p / jnp.where(denom > 0.0, denom, 1.0), 0.0)
        out = jnp.einsum("ijh,jhd->ihd", attn, xs)
        out_dict[dst].append(jnp.maximum(out, 0.0).reshape(Nd, HIDDEN))
    outs = jnp.stack(out_dict[target_node_type], axis=0)
    t = jnp.tanh(outs @ params["k_lin_w"] + params["k_lin_b"][None, None, :])
    score = jnp.sum(params["q"][None, :] * jnp.mean(t, axis=1), axis=-1)
    attn = jax.nn.softmax(score)
    sem = jnp.sum(attn[:, None, None] * outs, axis=0)
    lw, lb = params["lin"]
    return sem @ lw + lb


# ---------------------------------------------------------------- init/main --

def init_params(key, metadata, in_dims):
    node_types, edge_types = metadata
    params = {"proj": {}, "att": {}}
    for nt in node_types:
        key, k1, k2 = jax.random.split(key, 3)
        params["proj"][nt] = (
            0.1 * jax.random.normal(k1, (in_dims[nt], HIDDEN), jnp.float32),
            0.01 * jax.random.normal(k2, (HIDDEN,), jnp.float32))
    for et in edge_types:
        key, k1, k2 = jax.random.split(key, 3)
        params["att"][et] = (
            0.1 * jax.random.normal(k1, (HEADS, HEAD_DIM), jnp.float32),
            0.1 * jax.random.normal(k2, (HEADS, HEAD_DIM), jnp.float32))
    key, k1, k2, k3, k4, k5 = jax.random.split(key, 6)
    params["k_lin_w"] = 0.1 * jax.random.normal(k1, (HIDDEN, HIDDEN), jnp.float32)
    params["k_lin_b"] = 0.01 * jax.random.normal(k2, (HIDDEN,), jnp.float32)
    params["q"] = 0.1 * jax.random.normal(k3, (HIDDEN,), jnp.float32)
    params["lin"] = (
        0.1 * jax.random.normal(k4, (HIDDEN, OUT_CHANNELS), jnp.float32),
        0.01 * jax.random.normal(k5, (OUT_CHANNELS,), jnp.float32))
    return params


if __name__ == "__main__":
    key = jax.random.PRNGKey(0)

    metadata = (["author", "paper"],
                [("author", "writes", "paper"),
                 ("paper", "cites", "paper"),
                 ("paper", "rev_writes", "author")])
    target = "paper"
    num_nodes = {"author": 40, "paper": 72}
    in_dims = {"author": 12, "paper": 20}

    key, kx1, kx2 = jax.random.split(key, 3)
    x_dict = {"author": jax.random.normal(kx1, (num_nodes["author"], 12),
                                          jnp.float32),
              "paper": jax.random.normal(kx2, (num_nodes["paper"], 20),
                                         jnp.float32)}

    edge_index_dict = {}
    for et in metadata[1]:
        src, _, dst = et
        key, ke = jax.random.split(key)
        mask = np.asarray(
            jax.random.uniform(ke, (num_nodes[dst], num_nodes[src])) < 0.35)
        d_idx, s_idx = np.nonzero(mask)
        edge_index_dict[et] = jnp.asarray(
            np.stack([s_idx, d_idx]).astype(np.int32))

    key, kp = jax.random.split(key)
    params = init_params(kp, metadata, in_dims)

    # tile_nd=32 -> 3 destination tiles at this size (exercises the tiled,
    # "parallel" grid path while staying int8-packing aligned).
    out = han_forward(params, x_dict, edge_index_dict, metadata, target,
                      tile_nd=32)
    out = jax.block_until_ready(out)

    ref = han_forward_ref(params, x_dict, edge_index_dict, metadata, target)
    assert out.shape == (num_nodes[target], OUT_CHANNELS)
    np.testing.assert_allclose(np.asarray(out), np.asarray(ref),
                               rtol=1e-4, atol=1e-4)
    print("KERNEL_OK")
</pallas_src>

<mosaic_0001>
module attributes {stable_mosaic.version = 11 : i64} {
  func.func @kernel(%arg0: i32, %arg1: memref<96x20xf32, #tpu.memory_space<vmem>>, %arg2: memref<20x32xf32, #tpu.memory_space<vmem>>, %arg3: memref<1x32xf32, #tpu.memory_space<vmem>>, %arg4: memref<40x12xf32, #tpu.memory_space<vmem>>, %arg5: memref<12x32xf32, #tpu.memory_space<vmem>>, %arg6: memref<1x32xf32, #tpu.memory_space<vmem>>, %arg7: memref<96x32xf32, #tpu.memory_space<vmem>>, %arg8: memref<40x32xf32, #tpu.memory_space<vmem>>) attributes {dimension_semantics = [#tpu.dimension_semantics<arbitrary>], iteration_bounds = array<i64: 1>, scalar_prefetch = 0 : i64, scratch_operands = 0 : i64, tpu.core_type = #tpu.core_type<tc>, window_params = [{pipeline_mode = #tpu.pipeline_mode<synchronous>, transform_indices = @transform_0, window_bounds = array<i64: 96, 20>}, {pipeline_mode = #tpu.pipeline_mode<synchronous>, transform_indices = @transform_1, window_bounds = array<i64: 20, 32>}, {pipeline_mode = #tpu.pipeline_mode<synchronous>, transform_indices = @transform_2, window_bounds = array<i64: 1, 32>}, {pipeline_mode = #tpu.pipeline_mode<synchronous>, transform_indices = @transform_3, window_bounds = array<i64: 40, 12>}, {pipeline_mode = #tpu.pipeline_mode<synchronous>, transform_indices = @transform_4, window_bounds = array<i64: 12, 32>}, {pipeline_mode = #tpu.pipeline_mode<synchronous>, transform_indices = @transform_5, window_bounds = array<i64: 1, 32>}, {pipeline_mode = #tpu.pipeline_mode<synchronous>, transform_indices = @transform_6, window_bounds = array<i64: 96, 32>}, {pipeline_mode = #tpu.pipeline_mode<synchronous>, transform_indices = @transform_7, window_bounds = array<i64: 40, 32>}]} {
    %c0 = arith.constant 0 : index
    %c0_0 = arith.constant 0 : index
    %0 = vector.load %arg1[%c0, %c0_0] : memref<96x20xf32, #tpu.memory_space<vmem>>, vector<96x20xf32>
    %c0_1 = arith.constant 0 : index
    %c0_2 = arith.constant 0 : index
    %1 = vector.load %arg2[%c0_1, %c0_2] : memref<20x32xf32, #tpu.memory_space<vmem>>, vector<20x32xf32>
    %cst = arith.constant dense<0.000000e+00> : vector<96x32xf32>
    %2 = tpu.matmul %0, %1, %cst {dimension_numbers = #tpu.dot_dimension_numbers<[1], [0], [0], [1], [0, 0, 1, 1], [], []>} : vector<96x20xf32>, vector<20x32xf32>, vector<96x32xf32> -> vector<96x32xf32>
    %c0_3 = arith.constant 0 : index
    %c0_4 = arith.constant 0 : index
    %3 = vector.load %arg3[%c0_3, %c0_4] : memref<1x32xf32, #tpu.memory_space<vmem>>, vector<1x32xf32>
    %4 = vector.broadcast %3 : vector<1x32xf32> to vector<96x32xf32>
    %5 = arith.addf %2, %4 : vector<96x32xf32>
    %c0_5 = arith.constant 0 : index
    %c0_6 = arith.constant 0 : index
    %6 = vector.load %arg7[%c0_5, %c0_6] : memref<96x32xf32, #tpu.memory_space<vmem>>, vector<96x32xf32>
    tpu.vector_store %arg7[%c0_5, %c0_6], %5 {strides = array<i32>} : memref<96x32xf32, #tpu.memory_space<vmem>>, vector<96x32xf32>,
    %c0_7 = arith.constant 0 : index
    %c0_8 = arith.constant 0 : index
    %7 = vector.load %arg4[%c0_7, %c0_8] : memref<40x12xf32, #tpu.memory_space<vmem>>, vector<40x12xf32>
    %c0_9 = arith.constant 0 : index
    %c0_10 = arith.constant 0 : index
    %8 = vector.load %arg5[%c0_9, %c0_10] : memref<12x32xf32, #tpu.memory_space<vmem>>, vector<12x32xf32>
    %cst_11 = arith.constant dense<0.000000e+00> : vector<40x32xf32>
    %9 = tpu.matmul %7, %8, %cst_11 {dimension_numbers = #tpu.dot_dimension_numbers<[1], [0], [0], [1], [0, 0, 1, 1], [], []>} : vector<40x12xf32>, vector<12x32xf32>, vector<40x32xf32> -> vector<40x32xf32>
    %c0_12 = arith.constant 0 : index
    %c0_13 = arith.constant 0 : index
    %10 = vector.load %arg6[%c0_12, %c0_13] : memref<1x32xf32, #tpu.memory_space<vmem>>, vector<1x32xf32>
    %11 = vector.broadcast %10 : vector<1x32xf32> to vector<40x32xf32>
    %12 = arith.addf %9, %11 : vector<40x32xf32>
    %c0_14 = arith.constant 0 : index
    %c0_15 = arith.constant 0 : index
    %13 = vector.load %arg8[%c0_14, %c0_15] : memref<40x32xf32, #tpu.memory_space<vmem>>, vector<40x32xf32>
    tpu.vector_store %arg8[%c0_14, %c0_15], %12 {strides = array<i32>} : memref<40x32xf32, #tpu.memory_space<vmem>>, vector<40x32xf32>,
    return
  }
  func.func @transform_0(%arg0: i32) -> (i32, i32) {
    %c0_i32 = arith.constant 0 : i32
    %c0_i32_0 = arith.constant 0 : i32
    %c0_i32_1 = arith.constant 0 : i32
    return %c0_i32, %c0_i32_0 : i32, i32
  }
  func.func @transform_1(%arg0: i32) -> (i32, i32) {
    %c0_i32 = arith.constant 0 : i32
    %c0_i32_0 = arith.constant 0 : i32
    %c0_i32_1 = arith.constant 0 : i32
    return %c0_i32, %c0_i32_0 : i32, i32
  }
  func.func @transform_2(%arg0: i32) -> (i32, i32) {
    %c0_i32 = arith.constant 0 : i32
    %c0_i32_0 = arith.constant 0 : i32
    %c0_i32_1 = arith.constant 0 : i32
    return %c0_i32, %c0_i32_0 : i32, i32
  }
  func.func @transform_3(%arg0: i32) -> (i32, i32) {
    %c0_i32 = arith.constant 0 : i32
    %c0_i32_0 = arith.constant 0 : i32
    %c0_i32_1 = arith.constant 0 : i32
    return %c0_i32, %c0_i32_0 : i32, i32
  }
  func.func @transform_4(%arg0: i32) -> (i32, i32) {
    %c0_i32 = arith.constant 0 : i32
    %c0_i32_0 = arith.constant 0 : i32
    %c0_i32_1 = arith.constant 0 : i32
    return %c0_i32, %c0_i32_0 : i32, i32
  }
  func.func @transform_5(%arg0: i32) -> (i32, i32) {
    %c0_i32 = arith.constant 0 : i32
    %c0_i32_0 = arith.constant 0 : i32
    %c0_i32_1 = arith.constant 0 : i32
    return %c0_i32, %c0_i32_0 : i32, i32
  }
  func.func @transform_6(%arg0: i32) -> (i32, i32) {
    %c0_i32 = arith.constant 0 : i32
    %c0_i32_0 = arith.constant 0 : i32
    %c0_i32_1 = arith.constant 0 : i32
    return %c0_i32, %c0_i32_0 : i32, i32
  }
  func.func @transform_7(%arg0: i32) -> (i32, i32) {
    %c0_i32 = arith.constant 0 : i32
    %c0_i32_0 = arith.constant 0 : i32
    %c0_i32_1 = arith.constant 0 : i32
    return %c0_i32, %c0_i32_0 : i32, i32
  }
}

</mosaic_0001>

<llo_original>
// kernel: tpu_custom_call.1
$region0: #{tpu_custom_call.1}
  #allocation0 [shape = 'u32[]', space=smem, size = 0x4, offset = 0x4, fixed_abs, tag = 'smem constant byte address 0x4 - core index']
  #allocation1 [shape = 'u32[144,128]{1,0:T(1,128)}', space=vmem, size = 0x12000, scoped, tag = 'internal scratch']
  %s0 = inlined_call_operand.vmem [shape: f32[96,20], index: 0, kind: input, shape index: {}]
  %s1 = inlined_call_operand.vmem [shape: f32[20,32], index: 1, kind: input, shape index: {}]
  %s2 = inlined_call_operand.vmem [shape: f32[1,32], index: 2, kind: input, shape index: {}]
  %s3 = inlined_call_operand.vmem [shape: f32[40,12], index: 3, kind: input, shape index: {}]
  %s4 = inlined_call_operand.vmem [shape: f32[12,32], index: 4, kind: input, shape index: {}]
  %s5 = inlined_call_operand.vmem [shape: f32[1,32], index: 5, kind: input, shape index: {}]
  %s6 = inlined_call_operand.vmem [shape: f32[96,32], index: 6, kind: output, shape index: {0}]
  %s7 = inlined_call_operand.vmem [shape: f32[40,32], index: 7, kind: output, shape index: {1}]
  %8 = xla_tuple %s6, %s7
  %s9 = sld [smem:[#allocation0]]
  $region42: #{tpu_custom_call.1} parent=0
    _
  %s11 = ssub.s32 1, %s9
  %s12 = scalar_select 0, %s11, %s9
  // Predicated region
  $region2: #{tpu_custom_call.1} parent=0 // pred_check
    _
  $region3: #{tpu_custom_call.1} parent=0 // pred_check_branch
    %14 = sbr.rel (0) target = $region5
  $region4: #{tpu_custom_call.1} parent=0 // pred_region
    _
  $region5: #{tpu_custom_call.1} parent=0 // pred_fallthru
    _
  // Predicated region
  $region6: #{tpu_custom_call.1} parent=0 // pred_check
    _
  $region7: #{tpu_custom_call.1} parent=0 // pred_check_branch
    %16 = sbr.rel (0) target = $region9
  $region8: #{tpu_custom_call.1} parent=0 // pred_region
    _
  $region9: #{tpu_custom_call.1} parent=0 // pred_fallthru
    _
  // Predicated region
  $region10: #{tpu_custom_call.1} parent=0 // pred_check
    _
  $region11: #{tpu_custom_call.1} parent=0 // pred_check_branch
    %18 = sbr.rel (0) target = $region13
  $region12: #{tpu_custom_call.1} parent=0 // pred_region
    _
  $region13: #{tpu_custom_call.1} parent=0 // pred_fallthru
    _
  // Predicated region
  $region14: #{tpu_custom_call.1} parent=0 // pred_check
    _
  $region15: #{tpu_custom_call.1} parent=0 // pred_check_branch
    %20 = sbr.rel (0) target = $region17
  $region16: #{tpu_custom_call.1} parent=0 // pred_region
    _
  $region17: #{tpu_custom_call.1} parent=0 // pred_fallthru
    _
  // Predicated region
  $region18: #{tpu_custom_call.1} parent=0 // pred_check
    _
  $region19: #{tpu_custom_call.1} parent=0 // pred_check_branch
    %22 = sbr.rel (0) target = $region21
  $region20: #{tpu_custom_call.1} parent=0 // pred_region
    _
  $region21: #{tpu_custom_call.1} parent=0 // pred_fallthru
    _
  // Predicated region
  $region22: #{tpu_custom_call.1} parent=0 // pred_check
    _
  $region23: #{tpu_custom_call.1} parent=0 // pred_check_branch
    %24 = sbr.rel (0) target = $region25
  $region24: #{tpu_custom_call.1} parent=0 // pred_region
    _
  $region25: #{tpu_custom_call.1} parent=0 // pred_fallthru
    _
  %v25 = vld [vmem:[%s0] sm:$0xff]
  %v26 = vld [vmem:[%s0 + $0x8] sm:$0xff]
  %v27 = vld [vmem:[%s0 + $0x10] sm:$0xff]
  %v28 = vld [vmem:[%s0 + $0x18] sm:$0xff]
  %v29 = vld [vmem:[%s0 + $0x20] sm:$0xff]
  %v30 = vld [vmem:[%s0 + $0x28] sm:$0xff]
  %v31 = vld [vmem:[%s0 + $0x30] sm:$0xff]
  %v32 = vld [vmem:[%s0 + $0x38] sm:$0xff]
  %v33 = vld [vmem:[%s0 + $0x40] sm:$0xff]
  %v34 = vld [vmem:[%s0 + $0x48] sm:$0xff]
  %v35 = vld [vmem:[%s0 + $0x50] sm:$0xff]
  %v36 = vld [vmem:[%s0 + $0x58] sm:$0xff]
  %v37 = vld [vmem:[%s1] sm:$0xff]
  %v38 = vld [vmem:[%s1 + $0x8] sm:$0xff]
  %v39 = vld [vmem:[%s1 + $0x10] sm:$0xf]
  %v40 = vld [vmem:[%s2] sm:$0x1]
  %v42 = vlaneseq
  %v43 = vshrl.u32 %v42, 7
  %v44 = vsub.s32 0, %v43
  %v45 = vrot.slane %v40, %v44
  %vm47 = vcmask 162816
  %v49 = vsel %vm47, %v25, 0
  %v52 = vsel %vm47, %v26, 0
  %v55 = vsel %vm47, %v27, 0
  %v58 = vsel %vm47, %v28, 0
  %v61 = vsel %vm47, %v29, 0
  %v64 = vsel %vm47, %v30, 0
  %v67 = vsel %vm47, %v31, 0
  %v70 = vsel %vm47, %v32, 0
  %v73 = vsel %vm47, %v33, 0
  %v76 = vsel %vm47, %v34, 0
  %v79 = vsel %vm47, %v35, 0
  %v82 = vsel %vm47, %v36, 0
  %vm84 = vcmask 1043456
  %v86 = vsel %vm84, %v39, 0
  %88 = vmatprep.subr.mxu0 0.0
  %89 = vmatpush1.msra.mxu0 %v37
  %90 = vmatprep.subr.mxu0 0.0
  %91 = vmatpush1.msra.mxu0 %v38
  %92 = vmatprep.subr.mxu0 0.0
  %93 = vmatpush1.msra.mxu0 %v86
  %94 = vmatprep.subr.mxu0 0.0
  %95 = vmatpush1.msra.mxu0 0.0
  %96 = vmatprep.subr.mxu0 0.0
  %97 = vmatpush1.msra.mxu0 0.0
  %98 = vmatprep.subr.mxu0 0.0
  %99 = vmatpush1.msra.mxu0 0.0
  %100 = vmatprep.subr.mxu0 0.0
  %101 = vmatpush1.msra.mxu0 0.0
  %102 = vmatprep.subr.mxu0 0.0
  %103 = vmatpush1.msra.mxu0 0.0
  %104 = vmatprep.subr.mxu0 0.0
  %105 = vmatpush1.msra.mxu0 0.0
  %106 = vmatprep.subr.mxu0 0.0
  %107 = vmatpush1.msra.mxu0 0.0
  %108 = vmatprep.subr.mxu0 0.0
  %109 = vmatpush1.msra.mxu0 0.0
  %110 = vmatprep.subr.mxu0 0.0
  %111 = vmatpush1.msra.mxu0 0.0
  %112 = vmatprep.subr.mxu0 0.0
  %113 = vmatpush1.msra.mxu0 0.0
  %114 = vmatprep.subr.mxu0 0.0
  %115 = vmatpush1.msra.mxu0 0.0
  %116 = vmatprep.subr.mxu0 0.0
  %117 = vmatpush1.msra.mxu0 0.0
  %118 = vmatprep.subr.mxu0 0.0
  %119 = vmatpush1.msra.mxu0 0.0
  %120 = vmatprep.subr.mxu0 0.0
  %121 = vmatpush1.msra.mxu0 0.0
  %122 = vmatprep.subr.mxu0 0.0
  %123 = vmatpush1.msra.mxu0 0.0
  %124 = vmatprep.subr.mxu0 0.0
  %125 = vmatpush1.msra.mxu0 0.0
  %126 = vmatprep.subr.mxu0 0.0
  %127 = vmatpush1.msra.mxu0 0.0
  %128 = vmatprep.subr.mxu0 0.0
  %129 = vmatpush1.msra.mxu0 0.0
  %130 = vmatprep.subr.mxu0 0.0
  %131 = vmatpush1.msra.mxu0 0.0
  %132 = vmatprep.subr.mxu0 0.0
  %133 = vmatpush1.msra.mxu0 0.0
  %134 = vmatprep.subr.mxu0 0.0
  %135 = vmatpush1.msra.mxu0 0.0
  %136 = vmatprep.subr.mxu0 0.0
  %137 = vmatpush1.msra.mxu0 0.0
  %138 = vmatprep.subr.mxu0 0.0
  %139 = vmatpush1.msra.mxu0 0.0
  %140 = vmatprep.subr.mxu0 0.0
  %141 = vmatpush1.msra.mxu0 0.0
  %142 = vmatprep.subr.mxu0 0.0
  %143 = vmatpush1.msra.mxu0 0.0
  %144 = vmatprep.subr.mxu0 0.0
  %145 = vmatpush1.msra.mxu0 0.0
  %146 = vmatprep.subr.mxu0 0.0
  %147 = vmatpush1.msra.mxu0 0.0
  %148 = vmatprep.subr.mxu0 0.0
  %149 = vmatpush1.msra.mxu0 0.0
  %150 = vmatprep.subr.mxu0 0.0
  %151 = vmatpush1.msra.mxu0 0.0
  %152 = vmatprep.mubr.f32.mxu0 0.0
  %153 = vmatmul.mubr.f32.gmra.mrb[0].mxu0 %v49
  %v154 = vpop.f32.mrb[0].mxu0
  %v155 = vadd.f32 %v45, %v154
  %v156 = vpop.f32.mrb[0].mxu0
  %157 = vmatprep.mubr.f32.mxu0 0.0
  %158 = vmatmul.mubr.f32.gmra.mrb[0].mxu0 %v52
  %v159 = vpop.f32.mrb[0].mxu0
  %v160 = vadd.f32 %v45, %v159
  %v161 = vpop.f32.mrb[0].mxu0
  %162 = vmatprep.mubr.f32.mxu0 0.0
  %163 = vmatmul.mubr.f32.gmra.mrb[0].mxu0 %v55
  %v164 = vpop.f32.mrb[0].mxu0
  %v165 = vadd.f32 %v45, %v164
  %v166 = vpop.f32.mrb[0].mxu0
  %167 = vmatprep.mubr.f32.mxu0 0.0
  %168 = vmatmul.mubr.f32.gmra.mrb[0].mxu0 %v58
  %v169 = vpop.f32.mrb[0].mxu0
  %v170 = vadd.f32 %v45, %v169
  %v171 = vpop.f32.mrb[0].mxu0
  %172 = vmatprep.mubr.f32.mxu0 0.0
  %173 = vmatmul.mubr.f32.gmra.mrb[0].mxu0 %v61
  %v174 = vpop.f32.mrb[0].mxu0
  %v175 = vadd.f32 %v45, %v174
  %v176 = vpop.f32.mrb[0].mxu0
  %177 = vmatprep.mubr.f32.mxu0 0.0
  %178 = vmatmul.mubr.f32.gmra.mrb[0].mxu0 %v64
  %v179 = vpop.f32.mrb[0].mxu0
  %v180 = vadd.f32 %v45, %v179
  %v181 = vpop.f32.mrb[0].mxu0
  %182 = vmatprep.mubr.f32.mxu0 0.0
  %183 = vmatmul.mubr.f32.gmra.mrb[0].mxu0 %v67
  %v184 = vpop.f32.mrb[0].mxu0
  %v185 = vadd.f32 %v45, %v184
  %v186 = vpop.f32.mrb[0].mxu0
  %187 = vmatprep.mubr.f32.mxu0 0.0
  %188 = vmatmul.mubr.f32.gmra.mrb[0].mxu0 %v70
  %v189 = vpop.f32.mrb[0].mxu0
  %v190 = vadd.f32 %v45, %v189
  %v191 = vpop.f32.mrb[0].mxu0
  %192 = vmatprep.mubr.f32.mxu0 0.0
  %193 = vmatmul.mubr.f32.gmra.mrb[0].mxu0 %v73
  %v194 = vpop.f32.mrb[0].mxu0
  %v195 = vadd.f32 %v45, %v194
  %v196 = vpop.f32.mrb[0].mxu0
  %197 = vmatprep.mubr.f32.mxu0 0.0
  %198 = vmatmul.mubr.f32.gmra.mrb[0].mxu0 %v76
  %v199 = vpop.f32.mrb[0].mxu0
  %v200 = vadd.f32 %v45, %v199
  %v201 = vpop.f32.mrb[0].mxu0
  %202 = vmatprep.mubr.f32.mxu0 0.0
  %203 = vmatmul.mubr.f32.gmra.mrb[0].mxu0 %v79
  %v204 = vpop.f32.mrb[0].mxu0
  %v205 = vadd.f32 %v45, %v204
  %v206 = vpop.f32.mrb[0].mxu0
  %207 = vmatprep.mubr.f32.mxu0 0.0
  %208 = vmatmul.mubr.f32.gmra.mrb[0].mxu0 %v82
  %v209 = vpop.f32.mrb[0].mxu0
  %v210 = vadd.f32 %v45, %v209
  %v211 = vpop.f32.mrb[0].mxu0
  %212 = vdwg.mxu0
  %vm213 = vcmask 261120
  %214 = vst.msk [vmem:[%s6] sm:$0xff] %vm213, %v155
  %215 = vst.msk [vmem:[%s6 + $0x8] sm:$0xff] %vm213, %v160
  %216 = vst.msk [vmem:[%s6 + $0x10] sm:$0xff] %vm213, %v165
  %217 = vst.msk [vmem:[%s6 + $0x18] sm:$0xff] %vm213, %v170
  %218 = vst.msk [vmem:[%s6 + $0x20] sm:$0xff] %vm213, %v175
  %219 = vst.msk [vmem:[%s6 + $0x28] sm:$0xff] %vm213, %v180
  %220 = vst.msk [vmem:[%s6 + $0x30] sm:$0xff] %vm213, %v185
  %221 = vst.msk [vmem:[%s6 + $0x38] sm:$0xff] %vm213, %v190
  %222 = vst.msk [vmem:[%s6 + $0x40] sm:$0xff] %vm213, %v195
  %223 = vst.msk [vmem:[%s6 + $0x48] sm:$0xff] %vm213, %v200
  %224 = vst.msk [vmem:[%s6 + $0x50] sm:$0xff] %vm213, %v205
  %225 = vst.msk [vmem:[%s6 + $0x58] sm:$0xff] %vm213, %v210
  %v226 = vld [vmem:[%s3] sm:$0xff]
  %v227 = vld [vmem:[%s3 + $0x8] sm:$0xff]
  %v228 = vld [vmem:[%s3 + $0x10] sm:$0xff]
  %v229 = vld [vmem:[%s3 + $0x18] sm:$0xff]
  %v230 = vld [vmem:[%s3 + $0x20] sm:$0xff]
  %v231 = vld [vmem:[%s4] sm:$0xff]
  %v232 = vld [vmem:[%s4 + $0x8] sm:$0xf]
  %v233 = vld [vmem:[%s5] sm:$0x1]
  %v235 = vlaneseq
  %v236 = vshrl.u32 %v235, 7
  %v237 = vsub.s32 0, %v236
  %v238 = vrot.slane %v233, %v237
  %vm240 = vcmask 97280
  %v242 = vsel %vm240, %v226, 0
  %v245 = vsel %vm240, %v227, 0
  %v248 = vsel %vm240, %v228, 0
  %v251 = vsel %vm240, %v229, 0
  %v254 = vsel %vm240, %v230, 0
  %v257 = vsel %vm84, %v232, 0
  %259 = vmatprep.subr.mxu0 0.0
  %260 = vmatpush1.msra.mxu0 %v231
  %261 = vmatprep.subr.mxu0 0.0
  %262 = vmatpush1.msra.mxu0 %v257
  %263 = vmatprep.subr.mxu0 0.0
  %264 = vmatpush1.msra.mxu0 0.0
  %265 = vmatprep.subr.mxu0 0.0
  %266 = vmatpush1.msra.mxu0 0.0
  %267 = vmatprep.subr.mxu0 0.0
  %268 = vmatpush1.msra.mxu0 0.0
  %269 = vmatprep.subr.mxu0 0.0
  %270 = vmatpush1.msra.mxu0 0.0
  %271 = vmatprep.subr.mxu0 0.0
  %272 = vmatpush1.msra.mxu0 0.0
  %273 = vmatprep.subr.mxu0 0.0
  %274 = vmatpush1.msra.mxu0 0.0
  %275 = vmatprep.subr.mxu0 0.0
  %276 = vmatpush1.msra.mxu0 0.0
  %277 = vmatprep.subr.mxu0 0.0
  %278 = vmatpush1.msra.mxu0 0.0
  %279 = vmatprep.subr.mxu0 0.0
  %280 = vmatpush1.msra.mxu0 0.0
  %281 = vmatprep.subr.mxu0 0.0
  %282 = vmatpush1.msra.mxu0 0.0
  %283 = vmatprep.subr.mxu0 0.0
  %284 = vmatpush1.msra.mxu0 0.0
  %285 = vmatprep.subr.mxu0 0.0
  %286 = vmatpush1.msra.mxu0 0.0
  %287 = vmatprep.subr.mxu0 0.0
  %288 = vmatpush1.msra.mxu0 0.0
  %289 = vmatprep.subr.mxu0 0.0
  %290 = vmatpush1.msra.mxu0 0.0
  %291 = vmatprep.subr.mxu0 0.0
  %292 = vmatpush1.msra.mxu0 0.0
  %293 = vmatprep.subr.mxu0 0.0
  %294 = vmatpush1.msra.mxu0 0.0
  %295 = vmatprep.subr.mxu0 0.0
  %296 = vmatpush1.msra.mxu0 0.0
  %297 = vmatprep.subr.mxu0 0.0
  %298 = vmatpush1.msra.mxu0 0.0
  %299 = vmatprep.subr.mxu0 0.0
  %300 = vmatpush1.msra.mxu0 0.0
  %301 = vmatprep.subr.mxu0 0.0
  %302 = vmatpush1.msra.mxu0 0.0
  %303 = vmatprep.subr.mxu0 0.0
  %304 = vmatpush1.msra.mxu0 0.0
  %305 = vmatprep.subr.mxu0 0.0
  %306 = vmatpush1.msra.mxu0 0.0
  %307 = vmatprep.subr.mxu0 0.0
  %308 = vmatpush1.msra.mxu0 0.0
  %309 = vmatprep.subr.mxu0 0.0
  %310 = vmatpush1.msra.mxu0 0.0
  %311 = vmatprep.subr.mxu0 0.0
  %312 = vmatpush1.msra.mxu0 0.0
  %313 = vmatprep.subr.mxu0 0.0
  %314 = vmatpush1.msra.mxu0 0.0
  %315 = vmatprep.subr.mxu0 0.0
  %316 = vmatpush1.msra.mxu0 0.0
  %317 = vmatprep.subr.mxu0 0.0
  %318 = vmatpush1.msra.mxu0 0.0
  %319 = vmatprep.subr.mxu0 0.0
  %320 = vmatpush1.msra.mxu0 0.0
  %321 = vmatprep.subr.mxu0 0.0
  %322 = vmatpush1.msra.mxu0 0.0
  %323 = vmatprep.mubr.f32.mxu0 0.0
  %324 = vmatmul.mubr.f32.gmra.mrb[0].mxu0 %v242
  %v325 = vpop.f32.mrb[0].mxu0
  %v326 = vadd.f32 %v238, %v325
  %v327 = vpop.f32.mrb[0].mxu0
  %328 = vmatprep.mubr.f32.mxu0 0.0
  %329 = vmatmul.mubr.f32.gmra.mrb[0].mxu0 %v245
  %v330 = vpop.f32.mrb[0].mxu0
  %v331 = vadd.f32 %v238, %v330
  %v332 = vpop.f32.mrb[0].mxu0
  %333 = vmatprep.mubr.f32.mxu0 0.0
  %334 = vmatmul.mubr.f32.gmra.mrb[0].mxu0 %v248
  %v335 = vpop.f32.mrb[0].mxu0
  %v336 = vadd.f32 %v238, %v335
  %v337 = vpop.f32.mrb[0].mxu0
  %338 = vmatprep.mubr.f32.mxu0 0.0
  %339 = vmatmul.mubr.f32.gmra.mrb[0].mxu0 %v251
  %v340 = vpop.f32.mrb[0].mxu0
  %v341 = vadd.f32 %v238, %v340
  %v342 = vpop.f32.mrb[0].mxu0
  %343 = vmatprep.mubr.f32.mxu0 0.0
  %344 = vmatmul.mubr.f32.gmra.mrb[0].mxu0 %v254
  %v345 = vpop.f32.mrb[0].mxu0
  %v346 = vadd.f32 %v238, %v345
  %v347 = vpop.f32.mrb[0].mxu0
  %348 = vdwg.mxu0
  %349 = vst.msk [vmem:[%s7] sm:$0xff] %vm213, %v326
  %350 = vst.msk [vmem:[%s7 + $0x8] sm:$0xff] %vm213, %v331
  %351 = vst.msk [vmem:[%s7 + $0x10] sm:$0xff] %vm213, %v336
  %352 = vst.msk [vmem:[%s7 + $0x18] sm:$0xff] %vm213, %v341
  %353 = vst.msk [vmem:[%s7 + $0x20] sm:$0xff] %vm213, %v346
  // Predicated region
  $region26: #{tpu_custom_call.1} parent=0 // pred_check
    _
  $region27: #{tpu_custom_call.1} parent=0 // pred_check_branch
    %355 = sbr.rel (0) target = $region29
  $region28: #{tpu_custom_call.1} parent=0 // pred_region
    _
  $region29: #{tpu_custom_call.1} parent=0 // pred_fallthru
    _
  // Predicated region
  $region30: #{tpu_custom_call.1} parent=0 // pred_check
    _
  $region31: #{tpu_custom_call.1} parent=0 // pred_check_branch
    %357 = sbr.rel (0) target = $region33
  $region32: #{tpu_custom_call.1} parent=0 // pred_region
    _
  $region33: #{tpu_custom_call.1} parent=0 // pred_fallthru
    _
  // Predicated region
  $region34: #{tpu_custom_call.1} parent=0 // pred_check
    _
  $region35: #{tpu_custom_call.1} parent=0 // pred_check_branch
    %359 = sbr.rel (0) target = $region37
  $region36: #{tpu_custom_call.1} parent=0 // pred_region
    _
  $region37: #{tpu_custom_call.1} parent=0 // pred_fallthru
    _
  // Predicated region
  $region38: #{tpu_custom_call.1} parent=0 // pred_check
    _
  $region39: #{tpu_custom_call.1} parent=0 // pred_check_branch
    %361 = sbr.rel (0) target = $region41
  $region40: #{tpu_custom_call.1} parent=0 // pred_region
    _
  $region41: #{tpu_custom_call.1} parent=0 // pred_fallthru
    _

</llo_original>
